<compile_context>
chip_gen: v7x
topology: tpu7x:2x2x1
jax: 0.10.0
libtpu: 0.0.40
codegen_flags: <defaults>
</compile_context>

<pallas_src>
import functools

import jax
import jax.numpy as jnp
from jax.experimental import pallas as pl
from jax.experimental.pallas import tpu as pltpu


def _round_up(n, m):
    return ((n + m - 1) // m) * m


def _pal_a_kernel(wu_ref, protot_ref, x_ref, w1_ref, b1_ref, w2t_ref, b2_ref,
                  out_ref):
    """reward = ReLU(x@W1+b1) . (W2 @ a_i) + b2 . a_i  (one MXU matmul)."""
    # a_i as a (D_out, 1) column: one VPU broadcast-multiply over the
    # (D_out, P) prototype tile + one XLU lane reduce. The user row was
    # selected (and clamped) in the wrapper, so no SMEM table / scalar loop.
    a_col = jnp.sum(protot_ref[...] * wu_ref[...], axis=1, keepdims=True)

    # Fold a_i through the second linear layer, kept in f32 for accuracy:
    #   v_row[0, d] = sum_e W2[d, e] * a_i[e]   (VPU mult + XLU sublane reduce)
    # v_row is lane-dense so the final reduction needs no transpose and no
    # 1-column MXU matvec.
    # TODO(synk): for D_out >= ~512 move this fold onto the MXU (bf16 dot)
    #             and/or grid over D_out so it stops competing for VPU slots.
    v_row = jnp.sum(w2t_ref[...] * a_col, axis=0, keepdims=True)      # (1, D)
    c = jnp.sum(b2_ref[...] * a_col, axis=0, keepdims=True)           # (1, 1)

    # Hot path: one bf16 MXU matmul with f32 accumulation, bias+ReLU in f32.
    h = jnp.dot(x_ref[...], w1_ref[...], preferred_element_type=jnp.float32)
    h = jnp.maximum(h + b1_ref[...], 0.0)                             # (tb, D)

    # Final contraction on VPU+XLU against the resident h (avoids the MXU
    # fill/drain latency of a (tb, D) x (D, 1) matvec for a single column).
    out_ref[...] = jnp.sum(h * v_row, axis=1, keepdims=True) + c      # (tb, 1)


@functools.partial(jax.jit, static_argnames=("use_mean_user",))
def pal_a_forward(context, choice_embed, user_id, params, use_mean_user=False):
    """Wrapper: parameter plumbing + user-row selection; compute in-kernel."""
    del context  # f_context is dead code w.r.t. the returned reward.
    w1, b1, w2, b2 = params["w1"], params["b1"], params["w2"], params["b2"]
    prototypes, user_weights = params["prototypes"], params["user_weights"]

    B, D_in = choice_embed.shape
    D_out = w1.shape[1]
    U, P = user_weights.shape

    # ---- user mixing row (selected user or mean), computed once per call ---
    if use_mean_user:
        wu = jnp.mean(user_weights, axis=0)                       # (P,)
    else:
        # Clamp: TPU refs have no runtime OOB check, so never index past U.
        uid = jnp.clip(jnp.asarray(user_id, jnp.int32), 0, U - 1)
        wu = jnp.take(user_weights, uid, axis=0)                  # (P,)
    wu_row = wu.reshape(1, P).astype(jnp.float32)

    # ---- layout plumbing (tiny per-call transposes/reshapes of params) -----
    protot = jnp.transpose(prototypes)           # (D_out, P)
    w2t = jnp.transpose(w2)                      # w2t[e, d] = w2[d, e]
    b1_row = b1.reshape(1, D_out)
    b2_col = b2.reshape(D_out, 1)
    x_bf = choice_embed.astype(jnp.bfloat16)     # halves activation DMA
    w1_bf = w1.astype(jnp.bfloat16)              # MXU is natively bf16

    # ---- batch tiling: "parallel" grid over row tiles (feeds both v7x TCs) -
    if B <= 256:
        tb = _round_up(B, 8)
    else:
        tb = 256
    b_pad = _round_up(B, tb)
    if b_pad != B:
        x_bf = jnp.concatenate(
            [x_bf, jnp.zeros((b_pad - B, D_in), jnp.bfloat16)], axis=0)
    nb = b_pad // tb

    def _fixed(shape):
        return pl.BlockSpec(shape, lambda i: (0,) * len(shape))

    in_specs = [
        _fixed((1, P)),                                   # wu_row      f32
        _fixed((D_out, P)),                               # prototypes^T f32
        pl.BlockSpec((tb, D_in), lambda i: (i, 0)),       # x tile      bf16
        _fixed((D_in, D_out)),                            # W1          bf16
        _fixed((1, D_out)),                               # b1          f32
        _fixed((D_out, D_out)),                           # W2^T        f32
        _fixed((D_out, 1)),                               # b2          f32
    ]
    out_specs = pl.BlockSpec((tb, 1), lambda i: (i, 0))

    # VMEM budget from the actual resident blocks (x2 for double-buffering),
    # kept well under the v7x 64 MiB physical limit.
    block_bytes = (tb * D_in * 2 + D_in * D_out * 2        # bf16 x tile + W1
                   + D_out * D_out * 4 + D_out * P * 4     # f32 W2^T + protos
                   + P * 4 + 2 * D_out * 4 + tb * 4)       # wu, biases, out
    vmem_limit = int(min(100 * 1024 * 1024,
                         max(4 * 1024 * 1024, 2 * block_bytes + (1 << 20))))

    flops = (2 * b_pad * D_in * D_out        # x @ W1 (MXU)
             + 3 * b_pad * D_out             # bias+ReLU + h*v reduce
             + 2 * D_out * D_out             # W2 fold
             + 2 * D_out * P)                # prototype mix
    bytes_accessed = (2 * (b_pad * D_in + D_in * D_out)                 # bf16
                      + 4 * (D_out * D_out + D_out * P + P
                             + 2 * D_out + b_pad))                      # f32

    out = pl.pallas_call(
        _pal_a_kernel,
        out_shape=jax.ShapeDtypeStruct((b_pad, 1), jnp.float32),
        grid=(nb,),
        in_specs=in_specs,
        out_specs=out_specs,
        compiler_params=pltpu.CompilerParams(
            dimension_semantics=("parallel",),
            vmem_limit_bytes=vmem_limit),
        cost_estimate=pl.CostEstimate(flops=flops, transcendentals=0,
                                      bytes_accessed=bytes_accessed),
    )(wu_row, protot, x_bf, w1_bf, b1_row, w2t, b2_col)

    # (b_pad, 1) -> (B,): slice off any row padding, drop the unit lane dim.
    return out[:B, 0]


def init_params(key, input_dim, output_dim, num_prototypes, num_users):
    """Deterministic synthetic init mirroring the PyTorch module's shapes."""
    ks = jax.random.split(key, 6)
    return {
        # nn.Linear(input_dim, output_dim) stored as (in, out)
        "w1": jax.random.normal(ks[0], (input_dim, output_dim), jnp.float32) * 0.1,
        "b1": jax.random.normal(ks[1], (output_dim,), jnp.float32) * 0.1,
        # nn.Linear(output_dim, output_dim) stored as (in, out)
        "w2": jax.random.normal(ks[2], (output_dim, output_dim), jnp.float32) * 0.1,
        "b2": jax.random.normal(ks[3], (output_dim,), jnp.float32) * 0.1,
        # torch.randn(num_prototypes, output_dim)
        "prototypes": jax.random.normal(ks[4], (num_prototypes, output_dim),
                                        jnp.float32),
        # torch.rand(num_users, num_prototypes)
        "user_weights": jax.random.uniform(ks[5], (num_users, num_prototypes),
                                           jnp.float32),
    }


def _reference_forward(context, choice_embed, user_id, params, use_mean_user):
    """Pure-JAX f32 reference of the PyTorch forward (correctness check)."""
    def shared_mapping(x):
        h = jnp.maximum(x @ params["w1"] + params["b1"], 0.0)
        return h @ params["w2"] + params["b2"]
    _ = shared_mapping(context)  # f_context, unused
    f_choice = shared_mapping(choice_embed)
    if use_mean_user:
        wu = jnp.mean(params["user_weights"], axis=0)
    else:
        wu = params["user_weights"][user_id]
    a_i = wu @ params["prototypes"]
    return jnp.sum(f_choice * a_i, axis=1)


if __name__ == "__main__":
    # Small shapes consistent with the module's forward.
    B = 8              # batch
    INPUT_DIM = 32
    OUTPUT_DIM = 32
    NUM_PROTOTYPES = 4
    NUM_USERS = 5
    USER_ID = 2

    key = jax.random.PRNGKey(0)
    k_ctx, k_choice, k_params = jax.random.split(key, 3)

    context = jax.random.normal(k_ctx, (B, INPUT_DIM), jnp.float32)
    choice_embed = jax.random.normal(k_choice, (B, INPUT_DIM), jnp.float32)
    params = init_params(k_params, INPUT_DIM, OUTPUT_DIM, NUM_PROTOTYPES,
                         NUM_USERS)

    reward = pal_a_forward(context, choice_embed, USER_ID, params,
                           use_mean_user=False)
    reward = jax.block_until_ready(reward)

    # Also exercise the `user_id is None` branch (mean over users).
    reward_mean = pal_a_forward(context, choice_embed, 0, params,
                                use_mean_user=True)
    reward_mean = jax.block_until_ready(reward_mean)

    ref = _reference_forward(context, choice_embed, USER_ID, params, False)
    ref_mean = _reference_forward(context, choice_embed, None, params, True)
    assert reward.shape == (B,)
    assert reward_mean.shape == (B,)
    # Tolerance reflects (a) the algebraic fold's different f32 summation
    # order and (b) the bf16 MXU path for x @ W1 (f32 accumulation).
    assert jnp.allclose(reward, ref, atol=5e-2, rtol=5e-2)
    assert jnp.allclose(reward_mean, ref_mean, atol=5e-2, rtol=5e-2)

    print("KERNEL_OK")
</pallas_src>

<mosaic_0001>
module attributes {stable_mosaic.version = 11 : i64} {
  func.func @_pal_a_kernel(%arg0: i32, %arg1: memref<1x4xf32, #tpu.memory_space<vmem>>, %arg2: memref<32x4xf32, #tpu.memory_space<vmem>>, %arg3: memref<8x32xbf16, #tpu.memory_space<vmem>>, %arg4: memref<32x32xbf16, #tpu.memory_space<vmem>>, %arg5: memref<1x32xf32, #tpu.memory_space<vmem>>, %arg6: memref<32x32xf32, #tpu.memory_space<vmem>>, %arg7: memref<32x1xf32, #tpu.memory_space<vmem>>, %arg8: memref<8x1xf32, #tpu.memory_space<vmem>>) attributes {dimension_semantics = [#tpu.dimension_semantics<parallel>], iteration_bounds = array<i64: 1>, scalar_prefetch = 0 : i64, scratch_operands = 0 : i64, tpu.core_type = #tpu.core_type<tc>, window_params = [{pipeline_mode = #tpu.pipeline_mode<synchronous>, transform_indices = @transform_0, window_bounds = array<i64: 1, 4>}, {pipeline_mode = #tpu.pipeline_mode<synchronous>, transform_indices = @transform_1, window_bounds = array<i64: 32, 4>}, {transform_indices = @transform_2, window_bounds = array<i64: 8, 32>}, {pipeline_mode = #tpu.pipeline_mode<synchronous>, transform_indices = @transform_3, window_bounds = array<i64: 32, 32>}, {pipeline_mode = #tpu.pipeline_mode<synchronous>, transform_indices = @transform_4, window_bounds = array<i64: 1, 32>}, {pipeline_mode = #tpu.pipeline_mode<synchronous>, transform_indices = @transform_5, window_bounds = array<i64: 32, 32>}, {pipeline_mode = #tpu.pipeline_mode<synchronous>, transform_indices = @transform_6, window_bounds = array<i64: 32, 1>}, {transform_indices = @transform_7, window_bounds = array<i64: 8, 1>}]} {
    %c0 = arith.constant 0 : index
    %c0_0 = arith.constant 0 : index
    %0 = vector.load %arg2[%c0, %c0_0] : memref<32x4xf32, #tpu.memory_space<vmem>>, vector<32x4xf32>
    %c0_1 = arith.constant 0 : index
    %c0_2 = arith.constant 0 : index
    %1 = vector.load %arg1[%c0_1, %c0_2] : memref<1x4xf32, #tpu.memory_space<vmem>>, vector<1x4xf32>
    %2 = vector.broadcast %1 : vector<1x4xf32> to vector<32x4xf32>
    %3 = arith.mulf %0, %2 : vector<32x4xf32>
    %cst = arith.constant dense<0.000000e+00> : vector<32xf32>
    %4 = vector.multi_reduction <add>, %3, %cst [1] : vector<32x4xf32> to vector<32xf32>
    %5 = vector.shape_cast %4 : vector<32xf32> to vector<32x1xf32>
    %c0_3 = arith.constant 0 : index
    %c0_4 = arith.constant 0 : index
    %6 = vector.load %arg6[%c0_3, %c0_4] : memref<32x32xf32, #tpu.memory_space<vmem>>, vector<32x32xf32>
    %7 = vector.broadcast %5 : vector<32x1xf32> to vector<32x32xf32>
    %8 = arith.mulf %6, %7 : vector<32x32xf32>
    %cst_5 = arith.constant dense<0.000000e+00> : vector<32xf32>
    %9 = vector.multi_reduction <add>, %8, %cst_5 [0] : vector<32x32xf32> to vector<32xf32>
    %10 = vector.shape_cast %9 : vector<32xf32> to vector<1x32xf32>
    %c0_6 = arith.constant 0 : index
    %c0_7 = arith.constant 0 : index
    %11 = vector.load %arg7[%c0_6, %c0_7] : memref<32x1xf32, #tpu.memory_space<vmem>>, vector<32x1xf32>
    %12 = arith.mulf %11, %5 : vector<32x1xf32>
    %cst_8 = arith.constant dense<0.000000e+00> : vector<1xf32>
    %13 = vector.multi_reduction <add>, %12, %cst_8 [0] : vector<32x1xf32> to vector<1xf32>
    %14 = vector.shape_cast %13 : vector<1xf32> to vector<1x1xf32>
    %c0_9 = arith.constant 0 : index
    %c0_10 = arith.constant 0 : index
    %15 = vector.load %arg3[%c0_9, %c0_10] : memref<8x32xbf16, #tpu.memory_space<vmem>>, vector<8x32xbf16>
    %c0_11 = arith.constant 0 : index
    %c0_12 = arith.constant 0 : index
    %16 = vector.load %arg4[%c0_11, %c0_12] : memref<32x32xbf16, #tpu.memory_space<vmem>>, vector<32x32xbf16>
    %cst_13 = arith.constant dense<0.000000e+00> : vector<8x32xf32>
    %17 = tpu.matmul %15, %16, %cst_13 {dimension_numbers = #tpu.dot_dimension_numbers<[1], [0], [0], [1], [0, 0, 1, 1], [], []>} : vector<8x32xbf16>, vector<32x32xbf16>, vector<8x32xf32> -> vector<8x32xf32>
    %c0_14 = arith.constant 0 : index
    %c0_15 = arith.constant 0 : index
    %18 = vector.load %arg5[%c0_14, %c0_15] : memref<1x32xf32, #tpu.memory_space<vmem>>, vector<1x32xf32>
    %19 = vector.broadcast %18 : vector<1x32xf32> to vector<8x32xf32>
    %20 = arith.addf %17, %19 : vector<8x32xf32>
    %cst_16 = arith.constant 0.000000e+00 : f32
    %21 = vector.broadcast %cst_16 : f32 to vector<8x32xf32>
    %22 = arith.maximumf %20, %21 : vector<8x32xf32>
    %23 = vector.broadcast %10 : vector<1x32xf32> to vector<8x32xf32>
    %24 = arith.mulf %22, %23 : vector<8x32xf32>
    %cst_17 = arith.constant dense<0.000000e+00> : vector<8xf32>
    %25 = vector.multi_reduction <add>, %24, %cst_17 [1] : vector<8x32xf32> to vector<8xf32>
    %26 = vector.shape_cast %25 : vector<8xf32> to vector<8x1xf32>
    %27 = vector.broadcast %14 : vector<1x1xf32> to vector<8x1xf32>
    %28 = arith.addf %26, %27 : vector<8x1xf32>
    %c0_18 = arith.constant 0 : index
    %c0_19 = arith.constant 0 : index
    %29 = vector.load %arg8[%c0_18, %c0_19] : memref<8x1xf32, #tpu.memory_space<vmem>>, vector<8x1xf32>
    tpu.vector_store %arg8[%c0_18, %c0_19], %28 {strides = array<i32>} : memref<8x1xf32, #tpu.memory_space<vmem>>, vector<8x1xf32>,
    return
  }
  func.func @transform_0(%arg0: i32) -> (i32, i32) {
    %c0_i32 = arith.constant 0 : i32
    %c0_i32_0 = arith.constant 0 : i32
    %c0_i32_1 = arith.constant 0 : i32
    return %c0_i32, %c0_i32_0 : i32, i32
  }
  func.func @transform_1(%arg0: i32) -> (i32, i32) {
    %c0_i32 = arith.constant 0 : i32
    %c0_i32_0 = arith.constant 0 : i32
    %c0_i32_1 = arith.constant 0 : i32
    return %c0_i32, %c0_i32_0 : i32, i32
  }
  func.func @transform_2(%arg0: i32) -> (i32, i32) {
    %c0_i32 = arith.constant 0 : i32
    %c0_i32_0 = arith.constant 0 : i32
    return %arg0, %c0_i32 : i32, i32
  }
  func.func @transform_3(%arg0: i32) -> (i32, i32) {
    %c0_i32 = arith.constant 0 : i32
    %c0_i32_0 = arith.constant 0 : i32
    %c0_i32_1 = arith.constant 0 : i32
    return %c0_i32, %c0_i32_0 : i32, i32
  }
  func.func @transform_4(%arg0: i32) -> (i32, i32) {
    %c0_i32 = arith.constant 0 : i32
    %c0_i32_0 = arith.constant 0 : i32
    %c0_i32_1 = arith.constant 0 : i32
    return %c0_i32, %c0_i32_0 : i32, i32
  }
  func.func @transform_5(%arg0: i32) -> (i32, i32) {
    %c0_i32 = arith.constant 0 : i32
    %c0_i32_0 = arith.constant 0 : i32
    %c0_i32_1 = arith.constant 0 : i32
    return %c0_i32, %c0_i32_0 : i32, i32
  }
  func.func @transform_6(%arg0: i32) -> (i32, i32) {
    %c0_i32 = arith.constant 0 : i32
    %c0_i32_0 = arith.constant 0 : i32
    %c0_i32_1 = arith.constant 0 : i32
    return %c0_i32, %c0_i32_0 : i32, i32
  }
  func.func @transform_7(%arg0: i32) -> (i32, i32) {
    %c0_i32 = arith.constant 0 : i32
    %c0_i32_0 = arith.constant 0 : i32
    return %arg0, %c0_i32 : i32, i32
  }
}

</mosaic_0001>

<llo_original>
// kernel: pal_a_forward.1
$region0: #{pal_a_forward.1}
  #allocation0 [shape = 'u32[]', space=smem, size = 0x4, offset = 0x4, fixed_abs, tag = 'smem constant byte address 0x4 - core index']
  #allocation1 [shape = 'u32[144,128]{1,0:T(1,128)}', space=vmem, size = 0x12000, scoped, tag = 'internal scratch']
  %s0 = inlined_call_operand.vmem [shape: f32[1,4], index: 0, kind: input, shape index: {}]
  %s1 = inlined_call_operand.vmem [shape: f32[32,4], index: 1, kind: input, shape index: {}]
  %s2 = inlined_call_operand.vmem [shape: bf16[8,32], index: 2, kind: input, shape index: {}]
  %s3 = inlined_call_operand.vmem [shape: bf16[32,32], index: 3, kind: input, shape index: {}]
  %s4 = inlined_call_operand.vmem [shape: f32[1,32], index: 4, kind: input, shape index: {}]
  %s5 = inlined_call_operand.vmem [shape: f32[32,32], index: 5, kind: input, shape index: {}]
  %s6 = inlined_call_operand.vmem [shape: f32[32,1], index: 6, kind: input, shape index: {}]
  %s7 = inlined_call_operand.vmem [shape: f32[8,1], index: 7, kind: output, shape index: {}]
  %s8 = sld [smem:[#allocation0]]
  $region38: #{pal_a_forward.1} parent=0
    _
  %s10 = ssub.s32 1, %s8
  %s11 = scalar_select 0, %s10, %s8
  // Predicated region
  $region2: #{pal_a_forward.1} parent=0 // pred_check
    _
  $region3: #{pal_a_forward.1} parent=0 // pred_check_branch
    %13 = sbr.rel (0) target = $region5
  $region4: #{pal_a_forward.1} parent=0 // pred_region
    _
  $region5: #{pal_a_forward.1} parent=0 // pred_fallthru
    _
  // Predicated region
  $region6: #{pal_a_forward.1} parent=0 // pred_check
    _
  $region7: #{pal_a_forward.1} parent=0 // pred_check_branch
    %15 = sbr.rel (0) target = $region9
  $region8: #{pal_a_forward.1} parent=0 // pred_region
    _
  $region9: #{pal_a_forward.1} parent=0 // pred_fallthru
    _
  // Predicated region
  $region10: #{pal_a_forward.1} parent=0 // pred_check
    _
  $region11: #{pal_a_forward.1} parent=0 // pred_check_branch
    %17 = sbr.rel (0) target = $region13
  $region12: #{pal_a_forward.1} parent=0 // pred_region
    _
  $region13: #{pal_a_forward.1} parent=0 // pred_fallthru
    _
  // Predicated region
  $region14: #{pal_a_forward.1} parent=0 // pred_check
    _
  $region15: #{pal_a_forward.1} parent=0 // pred_check_branch
    %19 = sbr.rel (0) target = $region17
  $region16: #{pal_a_forward.1} parent=0 // pred_region
    _
  $region17: #{pal_a_forward.1} parent=0 // pred_fallthru
    _
  // Predicated region
  $region18: #{pal_a_forward.1} parent=0 // pred_check
    _
  $region19: #{pal_a_forward.1} parent=0 // pred_check_branch
    %21 = sbr.rel (0) target = $region21
  $region20: #{pal_a_forward.1} parent=0 // pred_region
    _
  $region21: #{pal_a_forward.1} parent=0 // pred_fallthru
    _
  // Predicated region
  $region22: #{pal_a_forward.1} parent=0 // pred_check
    _
  $region23: #{pal_a_forward.1} parent=0 // pred_check_branch
    %23 = sbr.rel (0) target = $region25
  $region24: #{pal_a_forward.1} parent=0 // pred_region
    _
  $region25: #{pal_a_forward.1} parent=0 // pred_fallthru
    _
  // Predicated region
  $region26: #{pal_a_forward.1} parent=0 // pred_check
    _
  $region27: #{pal_a_forward.1} parent=0 // pred_check_branch
    %25 = sbr.rel (0) target = $region29
  $region28: #{pal_a_forward.1} parent=0 // pred_region
    _
  $region29: #{pal_a_forward.1} parent=0 // pred_fallthru
    _
  %v27 = vld [vmem:[%s1] sm:$0xff]
  %v28 = vld [vmem:[%s1 + $0x8] sm:$0xff]
  %v29 = vld [vmem:[%s1 + $0x10] sm:$0xff]
  %v30 = vld [vmem:[%s1 + $0x18] sm:$0xff]
  %v31 = vld [vmem:[%s0] sm:$0x1]
  %v33 = vlaneseq
  %v34 = vshrl.u32 %v33, 7
  %v35 = vsub.s32 0, %v34
  %v36 = vrot.slane %v31, %v35
  %v38 = vmul.f32 %v27, %v36
  %v39 = vmul.f32 %v28, %v36
  %v40 = vmul.f32 %v29, %v36
  %v41 = vmul.f32 %v30, %v36
  %vm42 = vcmask 31744
  %v43 = vsel %vm42, %v38, 0.0
  %44 = vadd.xlane.f32.xlu0 %v43
  %v45 = vpop.xlane.xlu0 %44
  %v46 = vsel %vm42, %v39, 0.0
  %47 = vadd.xlane.f32.xlu0 %v46
  %v48 = vpop.xlane.xlu0 %47
  %v49 = vsel %vm42, %v40, 0.0
  %50 = vadd.xlane.f32.xlu0 %v49
  %v51 = vpop.xlane.xlu0 %50
  %v52 = vsel %vm42, %v41, 0.0
  %53 = vadd.xlane.f32.xlu0 %v52
  %v54 = vpop.xlane.xlu0 %53
  %v55 = vld [vmem:[%s5] sm:$0xff]
  %v56 = vld [vmem:[%s5 + $0x8] sm:$0xff]
  %v57 = vld [vmem:[%s5 + $0x10] sm:$0xff]
  %v58 = vld [vmem:[%s5 + $0x18] sm:$0xff]
  %v59 = vmul.f32 %v55, %v45
  %v60 = vmul.f32 %v56, %v48
  %v61 = vmul.f32 %v57, %v51
  %v62 = vmul.f32 %v58, %v54
  %vm63 = vcmask 261120
  %v64 = vsel %vm63, %v59, 0.0
  %v65 = vsel %vm63, %v60, 0.0
  %v66 = vadd.f32 %v64, %v65
  %v67 = vsel %vm63, %v61, 0.0
  %v68 = vadd.f32 %v66, %v67
  %v69 = vsel %vm63, %v62, 0.0
  %v70 = vadd.f32 %v68, %v69
  %v71 = vrot.slane %v70, 4
  %v72 = vadd.f32 %v70, %v71
  %v73 = vrot.slane %v72, 2
  %v74 = vadd.f32 %v72, %v73
  %v75 = vrot.slane %v74, 1
  %v76 = vadd.f32 %v74, %v75
  %v77 = vld [vmem:[%s6] sm:$0xff]
  %v78 = vld [vmem:[%s6 + $0x8] sm:$0xff]
  %v79 = vld [vmem:[%s6 + $0x10] sm:$0xff]
  %v80 = vld [vmem:[%s6 + $0x18] sm:$0xff]
  %v81 = vmul.f32 %v77, %v45
  %v82 = vmul.f32 %v78, %v48
  %v83 = vmul.f32 %v79, %v51
  %v84 = vmul.f32 %v80, %v54
  %vm85 = vcmask 7168
  %v86 = vsel %vm85, %v81, 0.0
  %v87 = vsel %vm85, %v82, 0.0
  %v88 = vadd.f32 %v86, %v87
  %v89 = vsel %vm85, %v83, 0.0
  %v90 = vadd.f32 %v88, %v89
  %v91 = vsel %vm85, %v84, 0.0
  %v92 = vadd.f32 %v90, %v91
  %v93 = vrot.slane %v92, 4
  %v94 = vadd.f32 %v92, %v93
  %v95 = vrot.slane %v94, 2
  %v96 = vadd.f32 %v94, %v95
  %v97 = vrot.slane %v96, 1
  %v98 = vadd.f32 %v96, %v97
  %v99 = vld [vmem:[%s2] sm:$0xf]
  %v100 = vld [vmem:[%s3] sm:$0xf]
  %v101 = vld [vmem:[%s3 + $0x4] sm:$0xf]
  %v102 = vld [vmem:[%s3 + $0x8] sm:$0xf]
  %v103 = vld [vmem:[%s3 + $0xc] sm:$0xf]
  %v104 = vld [vmem:[%s4] sm:$0x1]
  %v106 = vlaneseq
  %v107 = vshrl.u32 %v106, 7
  %v108 = vsub.s32 0, %v107
  %v109 = vrot.slane %v104, %v108
  %v115 = vunpack.c.l.b16 %v100
  %v116 = vunpack.c.l.b16 %v101
  %v117 = vunpack.c.l.b16 %v102
  %v118 = vunpack.c.l.b16 %v103
  %v119 = vpack.c.b16 %v116, %v115
  %v120 = vpack.c.b16 %v118, %v117
  %v124 = vsel %vm63, %v99, 0
  %126 = vmatprep.subr.bf16.mxu0 0
  %127 = vmatpush1.bf16.msra.mxu0 %v119
  %128 = vmatprep.subr.bf16.mxu0 0
  %129 = vmatpush1.bf16.msra.mxu0 %v120
  %130 = vmatprep.subr.bf16.mxu0 0
  %131 = vmatpush1.bf16.msra.mxu0 0
  %132 = vmatprep.subr.bf16.mxu0 0
  %133 = vmatpush1.bf16.msra.mxu0 0
  %134 = vmatprep.subr.bf16.mxu0 0
  %135 = vmatpush1.bf16.msra.mxu0 0
  %136 = vmatprep.subr.bf16.mxu0 0
  %137 = vmatpush1.bf16.msra.mxu0 0
  %138 = vmatprep.subr.bf16.mxu0 0
  %139 = vmatpush1.bf16.msra.mxu0 0
  %140 = vmatprep.subr.bf16.mxu0 0
  %141 = vmatpush1.bf16.msra.mxu0 0
  %142 = vmatprep.subr.bf16.mxu0 0
  %143 = vmatpush1.bf16.msra.mxu0 0
  %144 = vmatprep.subr.bf16.mxu0 0
  %145 = vmatpush1.bf16.msra.mxu0 0
  %146 = vmatprep.subr.bf16.mxu0 0
  %147 = vmatpush1.bf16.msra.mxu0 0
  %148 = vmatprep.subr.bf16.mxu0 0
  %149 = vmatpush1.bf16.msra.mxu0 0
  %150 = vmatprep.subr.bf16.mxu0 0
  %151 = vmatpush1.bf16.msra.mxu0 0
  %152 = vmatprep.subr.bf16.mxu0 0
  %153 = vmatpush1.bf16.msra.mxu0 0
  %154 = vmatprep.subr.bf16.mxu0 0
  %155 = vmatpush1.bf16.msra.mxu0 0
  %156 = vmatprep.subr.bf16.mxu0 0
  %157 = vmatpush1.bf16.msra.mxu0 0
  %158 = vmatprep.mubr.bf16.mxu0 0
  %159 = vmatmul.mubr.bf16.gmra.mrb[0].mxu0 %v124
  %v160 = vpop.f32.mrb[0].mxu0
  %v161 = vadd.f32 %v109, %v160
  %v162 = vpop.f32.mrb[0].mxu0
  %v163 = vpop.f32.mrb[0].mxu0
  %v164 = vpop.f32.mrb[0].mxu0
  %165 = vdwg.mxu0
  %v166 = vmax.f32 %v161, 0.0
  %v167 = vmul.f32 %v166, %v76
  %v168 = vsel %vm63, %v167, 0.0
  %169 = vadd.xlane.f32.xlu0 %v168
  %v170 = vpop.xlane.xlu0 %169
  %v171 = vadd.f32 %v170, %v98
  %172 = vst.msk [vmem:[%s7] sm:$0xff] %vm85, %v171
  // Predicated region
  $region30: #{pal_a_forward.1} parent=0 // pred_check
    _
  $region31: #{pal_a_forward.1} parent=0 // pred_check_branch
    %174 = sbr.rel (0) target = $region33
  $region32: #{pal_a_forward.1} parent=0 // pred_region
    _
  $region33: #{pal_a_forward.1} parent=0 // pred_fallthru
    _
  // Predicated region
  $region34: #{pal_a_forward.1} parent=0 // pred_check
    _
  $region35: #{pal_a_forward.1} parent=0 // pred_check_branch
    %176 = sbr.rel (0) target = $region37
  $region36: #{pal_a_forward.1} parent=0 // pred_region
    _
  $region37: #{pal_a_forward.1} parent=0 // pred_fallthru
    _

</llo_original>
